<compile_context>
chip_gen: v7x
topology: tpu7x:2x2x1
jax: 0.10.0
libtpu: 0.0.40
codegen_flags: <defaults>
</compile_context>

<pallas_src>
from functools import partial

import jax
import jax.numpy as jnp
from jax.experimental import pallas as pl
from jax.experimental.pallas import tpu as pltpu

_LANE = 128


def linear_kernel(w_ref, b_ref, xt_ref, ot_ref):
    """y^T = W x^T + b for Linear(2, 1), computed entirely on the VPU.

    w_ref : SMEM (2,)    -- the two weight scalars (W[0,0], W[0,1])
    b_ref : SMEM (1,)    -- the bias scalar
    xt_ref: VMEM (2, TB) -- transposed input tile, batch on the lane axis
    ot_ref: VMEM (1, TB) -- transposed output tile (lane-dense stores)
    """
    w0 = w_ref[0]
    w1 = w_ref[1]
    b0 = b_ref[0]
    x0 = xt_ref[0:1, :].astype(jnp.float32)   # (1, TB) static sublane slice
    x1 = xt_ref[1:2, :].astype(jnp.float32)   # (1, TB)
    ot_ref[...] = (x0 * w0 + x1 * w1 + b0).astype(ot_ref.dtype)


def _choose_tile(batch, max_tb):
    """Pick the lane-tile size for the batch axis."""
    if batch <= _LANE:
        return batch                              # single block == full array dims
    # >= 2 grid steps when the batch allows it (feeds both v7x TensorCores),
    # capped at max_tb so double-buffered VMEM stays ~24*max_tb bytes.
    half = pl.cdiv(pl.cdiv(batch, 2), _LANE) * _LANE
    return max(_LANE, min(max_tb, half))


@partial(jax.jit, static_argnames=("block_b",))
def linear_forward(x, weight, bias, *, block_b=512 * 1024):
    """nn.Linear(2, 1): y = x @ W^T + b, via the transposed lane-dense layout."""
    B, IN = x.shape
    OUT, IN_w = weight.shape
    assert IN == 2 and IN_w == 2 and OUT == 1, "kernel specialized to Linear(2, 1)"

    x_t = x.T                                     # (2, B); fused into the pallas
    #                                               operand via allow_input_fusion
    tb = _choose_tile(B, block_b)
    grid = (pl.cdiv(B, tb),)                      # partial last block allowed

    out_t = pl.pallas_call(
        linear_kernel,
        out_shape=jax.ShapeDtypeStruct((OUT, B), x.dtype),
        grid=grid,
        in_specs=[
            pl.BlockSpec(memory_space=pltpu.MemorySpace.SMEM),   # weight scalars
            pl.BlockSpec(memory_space=pltpu.MemorySpace.SMEM),   # bias scalar
            pl.BlockSpec((IN, tb), lambda i: (0, i)),            # x^T lane tile
        ],
        out_specs=pl.BlockSpec((OUT, tb), lambda i: (0, i)),
        compiler_params=pltpu.CompilerParams(
            dimension_semantics=("parallel",),            # shard batch over TCs
            vmem_limit_bytes=32 * 1024 * 1024,            # covers 24*tb @ tb=512K
            allow_input_fusion=[False, False, True],      # fuse transpose into x^T
        ),
        cost_estimate=pl.CostEstimate(
            flops=3 * B, transcendentals=0, bytes_accessed=12 * B),
    )(
        weight.reshape(OUT * IN).astype(jnp.float32),
        bias.reshape(OUT).astype(jnp.float32),
        x_t,
    )

    # (1, B) -> (B, 1): contiguous reshape, no extra HBM pass.
    return out_t.reshape(B, OUT)


class TestModelPallas:
    """JAX/Pallas equivalent of the PyTorch TestModel (nn.Linear(2, 1))."""

    def __init__(self, key):
        in_features, out_features = 2, 1
        # Mimic torch's default Linear init: U(-1/sqrt(in), 1/sqrt(in)).
        kw, kb = jax.random.split(key)
        bound = 1.0 / jnp.sqrt(jnp.float32(in_features))
        self.weight = jax.random.uniform(
            kw, (out_features, in_features), jnp.float32, -bound, bound)
        self.bias = jax.random.uniform(
            kb, (out_features,), jnp.float32, -bound, bound)

    def __call__(self, x):
        return linear_forward(x, self.weight, self.bias)


if __name__ == "__main__":
    key = jax.random.PRNGKey(0)
    model = TestModelPallas(key)

    # Same input as the original script: x = [[1.0, 2.0]]
    x = jnp.array([[1.0, 2.0]], dtype=jnp.float32)
    out = jax.block_until_ready(model(x))
    ref = x @ model.weight.T + model.bias
    assert out.shape == (1, 1), out.shape
    assert jnp.allclose(out, ref, atol=1e-6), (out, ref)

    # Exercise the multi-step grid path (>=2 blocks, partial last block, no pad).
    xb = jax.random.normal(jax.random.PRNGKey(1), (1027, 2), jnp.float32)
    outb = jax.block_until_ready(model(xb))
    refb = xb @ model.weight.T + model.bias
    assert outb.shape == (1027, 1), outb.shape
    assert jnp.allclose(outb, refb, atol=1e-5), "batched mismatch"

    print("KERNEL_OK")
</pallas_src>

<mosaic_0001>
module attributes {stable_mosaic.version = 11 : i64} {
  func.func @linear_kernel(%arg0: i32, %arg1: memref<2xf32, #tpu.memory_space<smem>>, %arg2: memref<1xf32, #tpu.memory_space<smem>>, %arg3: memref<2x1xf32, #tpu.memory_space<vmem>>, %arg4: memref<1x1xf32, #tpu.memory_space<vmem>>) attributes {dimension_semantics = [#tpu.dimension_semantics<parallel>], iteration_bounds = array<i64: 1>, scalar_prefetch = 0 : i64, scratch_operands = 0 : i64, tpu.core_type = #tpu.core_type<tc>, window_params = [{transform_indices = @transform_0, window_bounds = array<i64: 2>}, {transform_indices = @transform_1, window_bounds = array<i64: 1>}, {transform_indices = @transform_2, window_bounds = array<i64: 2, 1>}, {transform_indices = @transform_3, window_bounds = array<i64: 1, 1>}]} {
    %c0 = arith.constant 0 : index
    %0 = memref.load %arg1[%c0] : memref<2xf32, #tpu.memory_space<smem>>
    %c1 = arith.constant 1 : index
    %1 = memref.load %arg1[%c1] : memref<2xf32, #tpu.memory_space<smem>>
    %c0_0 = arith.constant 0 : index
    %2 = memref.load %arg2[%c0_0] : memref<1xf32, #tpu.memory_space<smem>>
    %c0_1 = arith.constant 0 : index
    %c0_2 = arith.constant 0 : index
    %3 = vector.load %arg3[%c0_1, %c0_2] : memref<2x1xf32, #tpu.memory_space<vmem>>, vector<1x1xf32>
    %c1_3 = arith.constant 1 : index
    %c0_4 = arith.constant 0 : index
    %4 = vector.load %arg3[%c1_3, %c0_4] : memref<2x1xf32, #tpu.memory_space<vmem>>, vector<1x1xf32>
    %5 = vector.broadcast %0 : f32 to vector<1x1xf32>
    %6 = arith.mulf %3, %5 : vector<1x1xf32>
    %7 = vector.broadcast %1 : f32 to vector<1x1xf32>
    %8 = arith.mulf %4, %7 : vector<1x1xf32>
    %9 = arith.addf %6, %8 : vector<1x1xf32>
    %10 = vector.broadcast %2 : f32 to vector<1x1xf32>
    %11 = arith.addf %9, %10 : vector<1x1xf32>
    %c0_5 = arith.constant 0 : index
    %c0_6 = arith.constant 0 : index
    %12 = vector.load %arg4[%c0_5, %c0_6] : memref<1x1xf32, #tpu.memory_space<vmem>>, vector<1x1xf32>
    tpu.vector_store %arg4[%c0_5, %c0_6], %11 {strides = array<i32>} : memref<1x1xf32, #tpu.memory_space<vmem>>, vector<1x1xf32>,
    return
  }
  func.func @transform_0(%arg0: i32) -> i32 {
    %c0_i32 = arith.constant 0 : i32
    %c0_i32_0 = arith.constant 0 : i32
    return %c0_i32 : i32
  }
  func.func @transform_1(%arg0: i32) -> i32 {
    %c0_i32 = arith.constant 0 : i32
    %c0_i32_0 = arith.constant 0 : i32
    return %c0_i32 : i32
  }
  func.func @transform_2(%arg0: i32) -> (i32, i32) {
    %c0_i32 = arith.constant 0 : i32
    %c0_i32_0 = arith.constant 0 : i32
    return %c0_i32, %arg0 : i32, i32
  }
  func.func @transform_3(%arg0: i32) -> (i32, i32) {
    %c0_i32 = arith.constant 0 : i32
    %c0_i32_0 = arith.constant 0 : i32
    return %c0_i32, %arg0 : i32, i32
  }
}

</mosaic_0001>

<llo_original>
// kernel: linear_forward.1
$region0: #{linear_forward.1}
  #allocation0 [shape = 'u32[]', space=smem, size = 0x4, offset = 0x4, fixed_abs, tag = 'smem constant byte address 0x4 - core index']
  #allocation1 [shape = 'u32[144,128]{1,0:T(1,128)}', space=vmem, size = 0x12000, scoped, tag = 'internal scratch']
  #allocation2 [shape = 'f32[1]{0:T(128)S(6)}', space=smem, size = 0x200, scoped, tag = 'scoped memory for linear_forward.1']
  %s0 = inlined_call_operand.vmem [shape: f32[2], index: 0, kind: input, shape index: {}]
  %s1 = inlined_call_operand.<no memory space> [shape: f32[1], index: 1, kind: input, shape index: {}]
  %s2 = inlined_call_operand.vmem [shape: f32[2,1], index: 2, kind: input, shape index: {}]
  %s3 = inlined_call_operand.hbm [shape: f32[1,1], index: 3, kind: output, shape index: {}]
  %s4 = sld [smem:[#allocation0]]
  $region26: #{linear_forward.1} parent=0
    _
  %s6 = ssub.s32 1, %s4
  %s7 = scalar_select 0, %s6, %s4
  %8 = sst [smem:[#allocation2]] %s1
  $region1: #{linear_forward.1} parent=0
    #allocation3 [shape = 'u8[512]{0}', space=smem, size = 0x200, scoped, tag = 'input window, operand 0, single buffered']
    #allocation4 [shape = 's32[1]{0}', space=sflag, size = 0x4, scoped, tag = 'scoped memory for linear_forward.1']
    #allocation5 [shape = 's32[1]{0}', space=sflag, size = 0x4, scoped, tag = 'scoped memory for linear_forward.1']
    #allocation6 [shape = 'u8[512]{0}', space=vmem, size = 0x400, scoped, tag = 'output window, operand 0, single buffered']
    %9 = vsyncpa [#allocation5], 0
    %10 = vsyncpa [#allocation4], 0
    // Predicated region
    $region2: #{linear_forward.1} parent=1 // pred_check
      _
    $region3: #{linear_forward.1} parent=1 // pred_check_branch
      %12 = sbr.rel (0) target = $region5
    $region4: #{linear_forward.1} parent=1 // pred_region
      %s14 = ssub.s32 16, 16
      %15 = vsyncadd [#allocation5], %s14
      %s17 = sshll.u32 %s0, 4
      %s18 = int_to_ptr.vmem [resolvable:$true] %s17
      %20 = dma.vmem_to_smem %s18, 16, [#allocation3], [#allocation5]
    $region5: #{linear_forward.1} parent=1 // pred_fallthru
      _
    // Predicated region
    $region6: #{linear_forward.1} parent=1 // pred_check
      _
    $region7: #{linear_forward.1} parent=1 // pred_check_branch
      %22 = sbr.rel (0) target = $region9
    $region8: #{linear_forward.1} parent=1 // pred_region
      _
    $region9: #{linear_forward.1} parent=1 // pred_fallthru
      _
    // Predicated region
    $region10: #{linear_forward.1} parent=1 // pred_check
      _
    $region11: #{linear_forward.1} parent=1 // pred_check_branch
      %24 = sbr.rel (0) target = $region13
    $region12: #{linear_forward.1} parent=1 // pred_region
      _
    $region13: #{linear_forward.1} parent=1 // pred_fallthru
      _
    // Predicated region
    $region14: #{linear_forward.1} parent=1 // pred_check
      _
    $region15: #{linear_forward.1} parent=1 // pred_check_branch
      %26 = sbr.rel (0) target = $region17
    $region16: #{linear_forward.1} parent=1 // pred_region
      %27 = dma.done [#allocation5], 16
    $region17: #{linear_forward.1} parent=1 // pred_fallthru
      _
    %28 = sfence
    %s29 = sld [smem:[#allocation3]]
    %s30 = sld [smem:[#allocation3 + $0x1]]
    %s31 = sld [smem:[#allocation2]]
    %v32 = vld [vmem:[%s2] sm:$0x1]
    %v33 = vld [vmem:[%s2 + $0x1] sm:$0x1]
    %v34 = vstv %s29
    %v35 = vmul.f32 %v32, %v34
    %v36 = vstv %s30
    %v37 = vmul.f32 %v33, %v36
    %v38 = vadd.f32 %v35, %v37
    %v39 = vstv %s31
    %v40 = vadd.f32 %v38, %v39
    %vm41 = vcmask 0
    %42 = vst.msk [vmem:[#allocation6] sm:$0x1] %vm41, %v40
    // Predicated region
    $region18: #{linear_forward.1} parent=1 // pred_check
      _
    $region19: #{linear_forward.1} parent=1 // pred_check_branch
      %44 = sbr.rel (0) target = $region21
    $region20: #{linear_forward.1} parent=1 // pred_region
      %s46 = ssub.s32 16, 16
      %47 = vsyncadd [#allocation4], %s46
      %s49 = sshll.u32 [#allocation6], 4
      %s50 = int_to_ptr.vmem [resolvable:$true] %s49
      %52 = dma.vmem_to_hbm [thread:$0]  %s50, 16, %s3, [#allocation4]
    $region21: #{linear_forward.1} parent=1 // pred_fallthru
      _
    // Predicated region
    $region22: #{linear_forward.1} parent=1 // pred_check
      _
    $region23: #{linear_forward.1} parent=1 // pred_check_branch
      %54 = sbr.rel (0) target = $region25
    $region24: #{linear_forward.1} parent=1 // pred_region
      %55 = dma.done [#allocation4], 16
    $region25: #{linear_forward.1} parent=1 // pred_fallthru
      _
    %56 = vsyncpa [#allocation4], 1
    %57 = vsyncpa [#allocation5], 1

</llo_original>
